<compile_context>
chip_gen: v7x
topology: tpu7x:2x2x1
jax: 0.10.0
libtpu: 0.0.40
codegen_flags: <defaults>
</compile_context>

<pallas_src>
import functools

import jax
import jax.numpy as jnp
from jax.experimental import pallas as pl
from jax.experimental.pallas import tpu as pltpu

_CANDIDATE_WIDTHS = (4096, 2048, 1024, 512, 256, 128)
_TARGET_TILE_BYTES = 4 * 1024 * 1024   # ~4 MiB/tile -> 3 arrays x 2 bufs = 24 MiB
_RAGGED_BLOCK_ELEMS = 64 * 1024        # block width for the (1, n) ragged fallback
_MIB = 1024 * 1024


def _vpu_has_native_bf16() -> bool:
    """v6e/v7x VPUs have bf16 ALUs; v5e and older do not (conservative default)."""
    try:
        kind = jax.devices()[0].device_kind.lower()
    except Exception:
        return False
    return not any(tag in kind for tag in ("v2", "v3", "v4", "v5"))


def _pick_block_rows(rows: int, target_rows: int, sublanes: int) -> int:
    """Pick a block row count that (a) is a multiple of `sublanes` (or the full
    dim), (b) keeps the grid >= 2 steps whenever rows > sublanes (megacore /
    pipelining), and (c) prefers exact divisors of `rows` (unmasked tail stores)."""
    if rows <= sublanes:
        return rows                                   # single full block
    cap = min(target_rows, ((rows - 1) // sublanes) * sublanes)   # < rows -> >=2 steps
    cap = max(cap, sublanes)
    d = cap
    while d >= max(sublanes, cap // 2):               # look for an exact divisor near cap
        if rows % d == 0:
            return d
        d -= sublanes
    return cap                                        # accept a masked partial tail block


def _mixup_kernel(w_ref, f1_ref, f2_ref, o_ref, *, compute_dtype):
    # w_ref: (1,) f32 raw weight in SMEM. Sigmoid is computed here on a (1,1)
    # vector (EUP slot is free in this mem-bound kernel) instead of as a
    # separate tiny XLA dispatch in the wrapper.
    mix = jax.nn.sigmoid(jnp.full((1, 1), w_ref[0], dtype=jnp.float32))
    mix = mix.astype(compute_dtype)
    f1 = f1_ref[...].astype(compute_dtype)
    f2 = f2_ref[...].astype(compute_dtype)
    # f2 + (f1 - f2) * mix  ==  f1 * mix + f2 * (1 - mix)   (FMA form)
    o_ref[...] = (f2 + (f1 - f2) * mix).astype(o_ref.dtype)


def mixup_pallas(feature1: jax.Array, feature2: jax.Array, weight: jax.Array) -> jax.Array:
    """out = f1 * sigmoid(weight) + f2 * (1 - sigmoid(weight)); shape-preserving."""
    assert feature1.shape == feature2.shape
    assert feature1.dtype == feature2.dtype
    dtype = feature1.dtype
    assert jnp.issubdtype(dtype, jnp.floating), "Mixup expects floating-point features"

    orig_shape = feature1.shape
    n = feature1.size
    itemsize = jnp.dtype(dtype).itemsize
    sublanes = max(8, 32 // itemsize)      # dtype-aware packed-row granularity

    # Native-dtype blend for bf16 on chips with bf16 VPUs; f32 path has no casts;
    # everything else (and v5e-or-older) upcasts to f32 in-register.
    if dtype == jnp.bfloat16 and _vpu_has_native_bf16():
        compute_dtype = jnp.bfloat16
    else:
        compute_dtype = jnp.float32

    w = weight.reshape(1).astype(jnp.float32)   # raw weight; sigmoid happens in-kernel
    kernel = functools.partial(_mixup_kernel, compute_dtype=compute_dtype)

    width = next((c for c in _CANDIDATE_WIDTHS if n % c == 0), None)
    if width is not None:
        # Common case: lane-dense (rows, width) slab, no padding.
        rows = n // width
        f1 = feature1.reshape(rows, width)
        f2 = feature2.reshape(rows, width)
        target_rows = max(
            sublanes, (_TARGET_TILE_BYTES // (width * itemsize)) // sublanes * sublanes)
        block_rows = _pick_block_rows(rows, target_rows, sublanes)
        block_shape = (block_rows, width)
        index_map = lambda i: (i, 0)
        grid = (pl.cdiv(rows, block_rows),)
        phys_rows = -(-block_rows // sublanes) * sublanes       # sublane padding
        block_phys_bytes = phys_rows * width * itemsize
    else:
        # Rare ragged case (n not a multiple of 128): stream a (1, n) slab with a
        # lane-masked tail block -- no jnp.pad, no extra HBM passes, no output slice.
        f1 = feature1.reshape(1, n)
        f2 = feature2.reshape(1, n)
        block_w = n if n <= _RAGGED_BLOCK_ELEMS else _RAGGED_BLOCK_ELEMS
        block_shape = (1, block_w)
        index_map = lambda i: (0, i)
        grid = (pl.cdiv(n, block_w),)
        block_phys_bytes = sublanes * block_w * itemsize        # (1, w) pads to a full tile

    # 3 arrays x 2 pipeline buffers + margin. Set explicitly so 4 MiB tiles fit on
    # v5e's 16 MiB default scoped VMEM, and stay well under v7x's 64 MiB physical.
    vmem_limit = int(min(48 * _MIB, max(12 * _MIB, 8 * block_phys_bytes)))

    out = pl.pallas_call(
        kernel,
        out_shape=jax.ShapeDtypeStruct(f1.shape, dtype),
        grid_spec=pl.GridSpec(
            grid=grid,
            in_specs=[
                pl.BlockSpec(memory_space=pltpu.MemorySpace.SMEM),   # raw weight scalar
                pl.BlockSpec(block_shape, index_map),                # feature1
                pl.BlockSpec(block_shape, index_map),                # feature2
            ],
            out_specs=pl.BlockSpec(block_shape, index_map),
        ),
        compiler_params=pltpu.CompilerParams(
            dimension_semantics=("parallel",),
            vmem_limit_bytes=vmem_limit,
        ),
    )(w, f1, f2)

    return out.reshape(orig_shape)


if __name__ == "__main__":
    # Deterministic parameter init (matches Mixup(learnable_factor=0.5)).
    learnable_factor = 0.5
    weight = jnp.array([learnable_factor], dtype=jnp.float32)

    key = jax.random.PRNGKey(0)
    k1, k2, k3, k4 = jax.random.split(key, 4)

    mix = jax.nn.sigmoid(weight[0])

    # NCHW features (lane-dense 2-D slab path).
    x1 = jax.random.normal(k1, (2, 4, 16, 16), dtype=jnp.float32)
    x2 = jax.random.normal(k2, (2, 4, 16, 16), dtype=jnp.float32)
    out = jax.block_until_ready(mixup_pallas(x1, x2, weight))
    ref = x1 * mix + x2 * (1.0 - mix)
    assert out.shape == x1.shape and out.dtype == x1.dtype
    assert jnp.allclose(out, ref, atol=1e-5, rtol=1e-5), "mismatch vs reference (slab path)"

    # Ragged element count (not a multiple of 128) -> padding-free fallback path.
    y1 = jax.random.normal(k3, (2, 3, 7, 7), dtype=jnp.float32)
    y2 = jax.random.normal(k4, (2, 3, 7, 7), dtype=jnp.float32)
    out_r = jax.block_until_ready(mixup_pallas(y1, y2, weight))
    ref_r = y1 * mix + y2 * (1.0 - mix)
    assert out_r.shape == y1.shape and out_r.dtype == y1.dtype
    assert jnp.allclose(out_r, ref_r, atol=1e-5, rtol=1e-5), "mismatch vs reference (ragged path)"

    print("KERNEL_OK")
</pallas_src>

<mosaic_0001>
module attributes {stable_mosaic.version = 11 : i64} {
  func.func @_mixup_kernel(%arg0: i32, %arg1: memref<1xf32, #tpu.memory_space<smem>>, %arg2: memref<1x2048xf32, #tpu.memory_space<vmem>>, %arg3: memref<1x2048xf32, #tpu.memory_space<vmem>>, %arg4: memref<1x2048xf32, #tpu.memory_space<vmem>>) attributes {dimension_semantics = [#tpu.dimension_semantics<parallel>], iteration_bounds = array<i64: 1>, scalar_prefetch = 0 : i64, scratch_operands = 0 : i64, tpu.core_type = #tpu.core_type<tc>, window_params = [{transform_indices = @transform_0, window_bounds = array<i64: 1>}, {transform_indices = @transform_1, window_bounds = array<i64: 1, 2048>}, {transform_indices = @transform_2, window_bounds = array<i64: 1, 2048>}, {transform_indices = @transform_3, window_bounds = array<i64: 1, 2048>}]} {
    %c0 = arith.constant 0 : index
    %0 = memref.load %arg1[%c0] : memref<1xf32, #tpu.memory_space<smem>>
    %1 = vector.broadcast %0 : f32 to vector<1x1xf32>
    %2 = arith.negf %1 : vector<1x1xf32>
    %3 = math.exp %2 : vector<1x1xf32>
    %cst = arith.constant 1.000000e+00 : f32
    %4 = vector.broadcast %cst : f32 to vector<1x1xf32>
    %5 = arith.addf %4, %3 : vector<1x1xf32>
    %6 = arith.divf %4, %5 : vector<1x1xf32>
    %c0_0 = arith.constant 0 : index
    %c0_1 = arith.constant 0 : index
    %7 = vector.load %arg2[%c0_0, %c0_1] : memref<1x2048xf32, #tpu.memory_space<vmem>>, vector<1x2048xf32>
    %c0_2 = arith.constant 0 : index
    %c0_3 = arith.constant 0 : index
    %8 = vector.load %arg3[%c0_2, %c0_3] : memref<1x2048xf32, #tpu.memory_space<vmem>>, vector<1x2048xf32>
    %9 = arith.subf %7, %8 : vector<1x2048xf32>
    %10 = vector.broadcast %6 : vector<1x1xf32> to vector<1x2048xf32>
    %11 = arith.mulf %9, %10 : vector<1x2048xf32>
    %12 = arith.addf %8, %11 : vector<1x2048xf32>
    %c0_4 = arith.constant 0 : index
    %c0_5 = arith.constant 0 : index
    %13 = vector.load %arg4[%c0_4, %c0_5] : memref<1x2048xf32, #tpu.memory_space<vmem>>, vector<1x2048xf32>
    tpu.vector_store %arg4[%c0_4, %c0_5], %12 {strides = array<i32>} : memref<1x2048xf32, #tpu.memory_space<vmem>>, vector<1x2048xf32>,
    return
  }
  func.func @transform_0(%arg0: i32) -> i32 {
    %c0_i32 = arith.constant 0 : i32
    %c0_i32_0 = arith.constant 0 : i32
    return %c0_i32 : i32
  }
  func.func @transform_1(%arg0: i32) -> (i32, i32) {
    %c0_i32 = arith.constant 0 : i32
    %c0_i32_0 = arith.constant 0 : i32
    return %arg0, %c0_i32 : i32, i32
  }
  func.func @transform_2(%arg0: i32) -> (i32, i32) {
    %c0_i32 = arith.constant 0 : i32
    %c0_i32_0 = arith.constant 0 : i32
    return %arg0, %c0_i32 : i32, i32
  }
  func.func @transform_3(%arg0: i32) -> (i32, i32) {
    %c0_i32 = arith.constant 0 : i32
    %c0_i32_0 = arith.constant 0 : i32
    return %arg0, %c0_i32 : i32, i32
  }
}

</mosaic_0001>

<llo_original>
// kernel: tpu_custom_call.1
$region0: #{tpu_custom_call.1}
  #allocation0 [shape = 'u32[]', space=smem, size = 0x4, offset = 0x4, fixed_abs, tag = 'smem constant byte address 0x4 - core index']
  #allocation1 [shape = 'u32[144,128]{1,0:T(1,128)}', space=vmem, size = 0x12000, scoped, tag = 'internal scratch']
  #allocation2 [shape = 'f32[1]{0:T(128)S(6)}', space=smem, size = 0x200, scoped, tag = 'scoped memory for tpu_custom_call.1']
  %s0 = inlined_call_operand.<no memory space> [shape: f32[1], index: 0, kind: input, shape index: {}]
  %s1 = inlined_call_operand.hbm [shape: f32[1,2048], index: 1, kind: input, shape index: {}]
  %s2 = inlined_call_operand.hbm [shape: f32[1,2048], index: 2, kind: input, shape index: {}]
  %s3 = inlined_call_operand.hbm [shape: f32[1,2048], index: 3, kind: output, shape index: {}]
  %s4 = sld [smem:[#allocation0]]
  $region30: #{tpu_custom_call.1} parent=0
    _
  %s6 = ssub.s32 1, %s4
  %s7 = scalar_select 0, %s6, %s4
  %8 = sst [smem:[#allocation2]] %s0
  $region1: #{tpu_custom_call.1} parent=0
    #allocation3 [shape = 'u8[8192]{0}', space=vmem, size = 0x2000, scoped, tag = 'input window, operand 1, single buffered']
    #allocation4 [shape = 's32[1]{0}', space=sflag, size = 0x4, scoped, tag = 'scoped memory for tpu_custom_call.1']
    #allocation5 [shape = 's32[1]{0}', space=sflag, size = 0x4, scoped, tag = 'scoped memory for tpu_custom_call.1']
    #allocation6 [shape = 'u8[8192]{0}', space=vmem, size = 0x2000, scoped, tag = 'input window, operand 2, single buffered']
    #allocation7 [shape = 's32[1]{0}', space=sflag, size = 0x4, scoped, tag = 'scoped memory for tpu_custom_call.1']
    #allocation8 [shape = 'u8[8192]{0}', space=vmem, size = 0x2000, scoped, tag = 'output window, operand 0, single buffered']
    %9 = vsyncpa [#allocation4], 0
    %10 = vsyncpa [#allocation7], 0
    %11 = vsyncpa [#allocation5], 0
    // Predicated region
    $region2: #{tpu_custom_call.1} parent=1 // pred_check
      _
    $region3: #{tpu_custom_call.1} parent=1 // pred_check_branch
      %13 = sbr.rel (0) target = $region5
    $region4: #{tpu_custom_call.1} parent=1 // pred_region
      _
    $region5: #{tpu_custom_call.1} parent=1 // pred_fallthru
      _
    // Predicated region
    $region6: #{tpu_custom_call.1} parent=1 // pred_check
      _
    $region7: #{tpu_custom_call.1} parent=1 // pred_check_branch
      %15 = sbr.rel (0) target = $region9
    $region8: #{tpu_custom_call.1} parent=1 // pred_region
      %s17 = ssub.s32 256, 256
      %18 = vsyncadd [#allocation4], %s17
      %s20 = sshll.u32 [#allocation3], 4
      %s21 = int_to_ptr.vmem [resolvable:$true] %s20
      %23 = dma.hbm_to_vmem [thread:$0]  %s1, 256, %s21, [#allocation4]
    $region9: #{tpu_custom_call.1} parent=1 // pred_fallthru
      _
    // Predicated region
    $region10: #{tpu_custom_call.1} parent=1 // pred_check
      _
    $region11: #{tpu_custom_call.1} parent=1 // pred_check_branch
      %25 = sbr.rel (0) target = $region13
    $region12: #{tpu_custom_call.1} parent=1 // pred_region
      %s27 = ssub.s32 256, 256
      %28 = vsyncadd [#allocation7], %s27
      %s30 = sshll.u32 [#allocation6], 4
      %s31 = int_to_ptr.vmem [resolvable:$true] %s30
      %33 = dma.hbm_to_vmem [thread:$0]  %s2, 256, %s31, [#allocation7]
    $region13: #{tpu_custom_call.1} parent=1 // pred_fallthru
      _
    // Predicated region
    $region14: #{tpu_custom_call.1} parent=1 // pred_check
      _
    $region15: #{tpu_custom_call.1} parent=1 // pred_check_branch
      %35 = sbr.rel (0) target = $region17
    $region16: #{tpu_custom_call.1} parent=1 // pred_region
      %36 = dma.done [#allocation4], 256
    $region17: #{tpu_custom_call.1} parent=1 // pred_fallthru
      _
    // Predicated region
    $region18: #{tpu_custom_call.1} parent=1 // pred_check
      _
    $region19: #{tpu_custom_call.1} parent=1 // pred_check_branch
      %38 = sbr.rel (0) target = $region21
    $region20: #{tpu_custom_call.1} parent=1 // pred_region
      %39 = dma.done [#allocation7], 256
    $region21: #{tpu_custom_call.1} parent=1 // pred_fallthru
      _
    %s40 = sld [smem:[#allocation2]]
    %v41 = vstv %s40
    %v42 = vxor.u32 %v41, 2147483648
    %v43 = vmul.f32 %v42, 1.442695
    %v44 = vpow.pop %v43
    %v45 = vadd.f32 %v44, 1.0
    %v46 = vrcp.pop %v45
    %v47 = vmul.f32 1.0, %v46
    %v48 = vld [vmem:[#allocation3] sm:$0xff]
    %v49 = vld [vmem:[#allocation3 + $0x8] sm:$0xff]
    %v50 = vld [vmem:[#allocation6] sm:$0xff]
    %v51 = vld [vmem:[#allocation6 + $0x8] sm:$0xff]
    %v52 = vsub.f32 %v48, %v50
    %v53 = vsub.f32 %v49, %v51
    %v54 = vmul.f32 %v52, %v47
    %v55 = vmul.f32 %v53, %v47
    %v56 = vadd.f32 %v50, %v54
    %v57 = vadd.f32 %v51, %v55
    %58 = vst [vmem:[#allocation8] sm:$0xff] %v56
    %59 = vst [vmem:[#allocation8 + $0x8] sm:$0xff] %v57
    // Predicated region
    $region22: #{tpu_custom_call.1} parent=1 // pred_check
      _
    $region23: #{tpu_custom_call.1} parent=1 // pred_check_branch
      %61 = sbr.rel (0) target = $region25
    $region24: #{tpu_custom_call.1} parent=1 // pred_region
      %s63 = ssub.s32 256, 256
      %64 = vsyncadd [#allocation5], %s63
      %s66 = sshll.u32 [#allocation8], 4
      %s67 = int_to_ptr.vmem [resolvable:$true] %s66
      %69 = dma.vmem_to_hbm [thread:$0]  %s67, 256, %s3, [#allocation5]
    $region25: #{tpu_custom_call.1} parent=1 // pred_fallthru
      _
    // Predicated region
    $region26: #{tpu_custom_call.1} parent=1 // pred_check
      _
    $region27: #{tpu_custom_call.1} parent=1 // pred_check_branch
      %71 = sbr.rel (0) target = $region29
    $region28: #{tpu_custom_call.1} parent=1 // pred_region
      %72 = dma.done [#allocation5], 256
    $region29: #{tpu_custom_call.1} parent=1 // pred_fallthru
      _
    %73 = vsyncpa [#allocation4], 1
    %74 = vsyncpa [#allocation7], 1
    %75 = vsyncpa [#allocation5], 1

</llo_original>
